<compile_context>
chip_gen: v7x
topology: tpu7x:2x2x1
jax: 0.10.0
libtpu: 0.0.40
codegen_flags: <defaults>
</compile_context>

<pallas_src>
import functools

import jax
import jax.numpy as jnp
from jax.experimental import pallas as pl
from jax.experimental.pallas import tpu as pltpu


def _round_up(n, m):
    return ((n + m - 1) // m) * m


def _net_kernel(x_ref, w1, w2, w3, w45, w6, w7, bias_ref, out_ref, *, num_actions):
    """Forward pass for one (TB, num_states) batch tile; weights are VMEM-resident."""
    A = num_actions
    x = x_ref[...]

    # Packed biases: one row per layer, lane offset 0 (no lane shifts needed).
    b1 = bias_ref[0:1, 0:32]
    b2 = bias_ref[1:2, 0:32]
    b3 = bias_ref[2:3, 0:32]
    b45 = bias_ref[3:4, 0:A + 16]
    b6 = bias_ref[4:5, 0:8]
    b7 = bias_ref[5:6, 0:1]

    # Shared trunk: 3x (Linear + ReLU)
    h = jnp.maximum(jnp.dot(x, w1[...], preferred_element_type=jnp.float32) + b1, 0.0)
    h = jnp.maximum(jnp.dot(h, w2[...], preferred_element_type=jnp.float32) + b2, 0.0)
    h = jnp.maximum(jnp.dot(h, w3[...], preferred_element_type=jnp.float32) + b3, 0.0)

    # Fused policy-head + value-head-layer-1 matmul (shared input h).
    hv = jnp.dot(h, w45[...], preferred_element_type=jnp.float32) + b45

    # Policy head: numerically stable softmax over actions.
    logits = hv[:, :A]
    m = jnp.max(logits, axis=-1, keepdims=True)
    e = jnp.exp(logits - m)
    denom = jnp.sum(e, axis=-1, keepdims=True)
    # approx=False keeps full f32 accuracy (sum-to-1 within 1e-5 check).
    probs = e * pl.reciprocal(denom, approx=False)

    # Value head: ReLU, Linear(16->8) ReLU, Linear(8->1)
    v = jnp.maximum(hv[:, A:], 0.0)
    v = jnp.maximum(jnp.dot(v, w6[...], preferred_element_type=jnp.float32) + b6, 0.0)
    val = jnp.dot(v, w7[...], preferred_element_type=jnp.float32) + b7

    # Single lane-dense output slab: [softmax probs || value]
    out_ref[...] = jnp.concatenate([probs, val], axis=-1)


def net_forward(x, params, *, block_b=1024):
    """params: dict with wK (in,out) and bK (1,out) for K in 1..7. Returns (probs, value)."""
    B, S = x.shape
    A = params["w4"].shape[1]

    # Fuse policy-head + value-head-first weights that share the same input h.
    w45 = jnp.concatenate([params["w4"], params["w5"]], axis=1)  # (32, A+16)

    # Pack all biases into a single (8, 128) f32 array (exactly one vreg).
    bias = jnp.zeros((8, 128), jnp.float32)
    bias = bias.at[0, :32].set(params["b1"].reshape(-1))
    bias = bias.at[1, :32].set(params["b2"].reshape(-1))
    bias = bias.at[2, :32].set(params["b3"].reshape(-1))
    bias = bias.at[3, :A].set(params["b4"].reshape(-1))
    bias = bias.at[3, A:A + 16].set(params["b5"].reshape(-1))
    bias = bias.at[4, :8].set(params["b6"].reshape(-1))
    bias = bias.at[5, :1].set(params["b7"].reshape(-1))

    # Batch tiling: large tiles amortize per-grid-step overhead; the working set
    # per tile (~TB*(S+A+1)*4 B + <20 KB weights) is tiny even on v7x 64 MiB VMEM.
    TB = min(block_b, _round_up(B, 8))
    Bp = _round_up(B, TB)
    if Bp != B:
        x = jnp.pad(x, ((0, Bp - B), (0, 0)))
    grid = (Bp // TB,)

    flops_per_row = 2 * (S * 32 + 32 * 32 + 32 * 32 + 32 * (A + 16) + 16 * 8 + 8 * 1)
    weight_bytes = 4 * (S * 32 + 2 * 32 * 32 + 32 * (A + 16) + 16 * 8 + 8 * 1 + 8 * 128)
    cost = pl.CostEstimate(
        flops=int(Bp * flops_per_row),
        transcendentals=int(Bp * A),
        bytes_accessed=int(Bp * (S + A + 1) * 4 + weight_bytes),
    )

    kernel = functools.partial(_net_kernel, num_actions=A)

    out = pl.pallas_call(
        kernel,
        out_shape=jax.ShapeDtypeStruct((Bp, A + 1), jnp.float32),
        grid=grid,
        in_specs=[
            pl.BlockSpec((TB, S), lambda i: (i, 0)),          # x: tiled over batch
            pl.BlockSpec((S, 32), lambda i: (0, 0)),          # w1 (VMEM-resident)
            pl.BlockSpec((32, 32), lambda i: (0, 0)),         # w2
            pl.BlockSpec((32, 32), lambda i: (0, 0)),         # w3
            pl.BlockSpec((32, A + 16), lambda i: (0, 0)),     # w45 (fused w4|w5)
            pl.BlockSpec((16, 8), lambda i: (0, 0)),          # w6
            pl.BlockSpec((8, 1), lambda i: (0, 0)),           # w7
            pl.BlockSpec((8, 128), lambda i: (0, 0)),         # packed biases
        ],
        out_specs=pl.BlockSpec((TB, A + 1), lambda i: (i, 0)),
        compiler_params=pltpu.CompilerParams(
            dimension_semantics=("parallel",)),               # dual-TC sharding on v7x
        cost_estimate=cost,
    )(x, params["w1"], params["w2"], params["w3"], w45, params["w6"], params["w7"], bias)

    y1 = out[:B, :A]
    y2 = out[:B, A:A + 1]
    return y1, y2


def init_params(key, num_states, num_actions):
    """Deterministic synthetic init mirroring the torch module:
    weights ~ N(0, 0.5), biases ~ U(-1/sqrt(fan_in), 1/sqrt(fan_in))."""
    dims = [(num_states, 32), (32, 32), (32, 32), (32, num_actions),
            (32, 16), (16, 8), (8, 1)]
    params = {}
    keys = jax.random.split(key, 2 * len(dims))
    for i, (fan_in, fan_out) in enumerate(dims):
        wkey, bkey = keys[2 * i], keys[2 * i + 1]
        # stored transposed: (in, out), so kernel computes x @ W
        w = 0.5 * jax.random.normal(wkey, (fan_in, fan_out), dtype=jnp.float32)
        bound = 1.0 / jnp.sqrt(jnp.float32(fan_in))
        b = jax.random.uniform(bkey, (1, fan_out), dtype=jnp.float32,
                               minval=-bound, maxval=bound)
        params[f"w{i + 1}"] = w
        params[f"b{i + 1}"] = b
    return params


def reference_forward(x, params):
    """Pure-JAX reference to sanity-check the kernel."""
    h = jnp.maximum(x @ params["w1"] + params["b1"], 0.0)
    h = jnp.maximum(h @ params["w2"] + params["b2"], 0.0)
    h = jnp.maximum(h @ params["w3"] + params["b3"], 0.0)
    logits = h @ params["w4"] + params["b4"]
    y1 = jax.nn.softmax(logits, axis=-1)
    v = jnp.maximum(h @ params["w5"] + params["b5"], 0.0)
    v = jnp.maximum(v @ params["w6"] + params["b6"], 0.0)
    y2 = v @ params["w7"] + params["b7"]
    return y1, y2


if __name__ == "__main__":
    num_states, num_actions = 4, 2   # CartPole
    batch = 8

    key = jax.random.PRNGKey(0)
    pkey, xkey = jax.random.split(key)
    params = init_params(pkey, num_states, num_actions)
    x = jax.random.normal(xkey, (batch, num_states), dtype=jnp.float32)

    y1, y2 = net_forward(x, params)
    jax.block_until_ready((y1, y2))

    r1, r2 = reference_forward(x, params)
    assert y1.shape == (batch, num_actions) and y2.shape == (batch, 1)
    assert jnp.allclose(y1, r1, atol=1e-5, rtol=1e-5)
    assert jnp.allclose(y2, r2, atol=1e-5, rtol=1e-5)
    assert jnp.allclose(jnp.sum(y1, axis=-1), 1.0, atol=1e-5)

    # Also exercise a larger / non-multiple batch to check the tiling + padding path.
    xb = jax.random.normal(jax.random.PRNGKey(1), (3000, num_states), dtype=jnp.float32)
    yb1, yb2 = net_forward(xb, params, block_b=1024)
    jax.block_until_ready((yb1, yb2))
    rb1, rb2 = reference_forward(xb, params)
    assert yb1.shape == (3000, num_actions) and yb2.shape == (3000, 1)
    assert jnp.allclose(yb1, rb1, atol=1e-5, rtol=1e-5)
    assert jnp.allclose(yb2, rb2, atol=1e-5, rtol=1e-5)

    print("KERNEL_OK")
</pallas_src>

<mosaic_0001>
module attributes {stable_mosaic.version = 11 : i64} {
  func.func @_net_kernel(%arg0: i32, %arg1: memref<8x4xf32, #tpu.memory_space<vmem>>, %arg2: memref<4x32xf32, #tpu.memory_space<vmem>>, %arg3: memref<32x32xf32, #tpu.memory_space<vmem>>, %arg4: memref<32x32xf32, #tpu.memory_space<vmem>>, %arg5: memref<32x18xf32, #tpu.memory_space<vmem>>, %arg6: memref<16x8xf32, #tpu.memory_space<vmem>>, %arg7: memref<8x1xf32, #tpu.memory_space<vmem>>, %arg8: memref<8x128xf32, #tpu.memory_space<vmem>>, %arg9: memref<8x3xf32, #tpu.memory_space<vmem>>) attributes {dimension_semantics = [#tpu.dimension_semantics<parallel>], iteration_bounds = array<i64: 1>, scalar_prefetch = 0 : i64, scratch_operands = 0 : i64, tpu.core_type = #tpu.core_type<tc>, window_params = [{transform_indices = @transform_0, window_bounds = array<i64: 8, 4>}, {pipeline_mode = #tpu.pipeline_mode<synchronous>, transform_indices = @transform_1, window_bounds = array<i64: 4, 32>}, {pipeline_mode = #tpu.pipeline_mode<synchronous>, transform_indices = @transform_2, window_bounds = array<i64: 32, 32>}, {pipeline_mode = #tpu.pipeline_mode<synchronous>, transform_indices = @transform_3, window_bounds = array<i64: 32, 32>}, {pipeline_mode = #tpu.pipeline_mode<synchronous>, transform_indices = @transform_4, window_bounds = array<i64: 32, 18>}, {pipeline_mode = #tpu.pipeline_mode<synchronous>, transform_indices = @transform_5, window_bounds = array<i64: 16, 8>}, {pipeline_mode = #tpu.pipeline_mode<synchronous>, transform_indices = @transform_6, window_bounds = array<i64: 8, 1>}, {pipeline_mode = #tpu.pipeline_mode<synchronous>, transform_indices = @transform_7, window_bounds = array<i64: 8, 128>}, {transform_indices = @transform_8, window_bounds = array<i64: 8, 3>}]} {
    %c0 = arith.constant 0 : index
    %c0_0 = arith.constant 0 : index
    %0 = vector.load %arg1[%c0, %c0_0] : memref<8x4xf32, #tpu.memory_space<vmem>>, vector<8x4xf32>
    %c0_1 = arith.constant 0 : index
    %c0_2 = arith.constant 0 : index
    %1 = vector.load %arg8[%c0_1, %c0_2] : memref<8x128xf32, #tpu.memory_space<vmem>>, vector<1x32xf32>
    %c1 = arith.constant 1 : index
    %c0_3 = arith.constant 0 : index
    %2 = vector.load %arg8[%c1, %c0_3] : memref<8x128xf32, #tpu.memory_space<vmem>>, vector<1x32xf32>
    %c2 = arith.constant 2 : index
    %c0_4 = arith.constant 0 : index
    %3 = vector.load %arg8[%c2, %c0_4] : memref<8x128xf32, #tpu.memory_space<vmem>>, vector<1x32xf32>
    %c3 = arith.constant 3 : index
    %c0_5 = arith.constant 0 : index
    %4 = vector.load %arg8[%c3, %c0_5] : memref<8x128xf32, #tpu.memory_space<vmem>>, vector<1x18xf32>
    %c4 = arith.constant 4 : index
    %c0_6 = arith.constant 0 : index
    %5 = vector.load %arg8[%c4, %c0_6] : memref<8x128xf32, #tpu.memory_space<vmem>>, vector<1x8xf32>
    %c5 = arith.constant 5 : index
    %c0_7 = arith.constant 0 : index
    %6 = vector.load %arg8[%c5, %c0_7] : memref<8x128xf32, #tpu.memory_space<vmem>>, vector<1x1xf32>
    %c0_8 = arith.constant 0 : index
    %c0_9 = arith.constant 0 : index
    %7 = vector.load %arg2[%c0_8, %c0_9] : memref<4x32xf32, #tpu.memory_space<vmem>>, vector<4x32xf32>
    %cst = arith.constant dense<0.000000e+00> : vector<8x32xf32>
    %8 = tpu.matmul %0, %7, %cst {dimension_numbers = #tpu.dot_dimension_numbers<[1], [0], [0], [1], [0, 0, 1, 1], [], []>} : vector<8x4xf32>, vector<4x32xf32>, vector<8x32xf32> -> vector<8x32xf32>
    %9 = vector.broadcast %1 : vector<1x32xf32> to vector<8x32xf32>
    %10 = arith.addf %8, %9 : vector<8x32xf32>
    %cst_10 = arith.constant 0.000000e+00 : f32
    %11 = vector.broadcast %cst_10 : f32 to vector<8x32xf32>
    %12 = arith.maximumf %10, %11 : vector<8x32xf32>
    %c0_11 = arith.constant 0 : index
    %c0_12 = arith.constant 0 : index
    %13 = vector.load %arg3[%c0_11, %c0_12] : memref<32x32xf32, #tpu.memory_space<vmem>>, vector<32x32xf32>
    %cst_13 = arith.constant dense<0.000000e+00> : vector<8x32xf32>
    %14 = tpu.matmul %12, %13, %cst_13 {dimension_numbers = #tpu.dot_dimension_numbers<[1], [0], [0], [1], [0, 0, 1, 1], [], []>} : vector<8x32xf32>, vector<32x32xf32>, vector<8x32xf32> -> vector<8x32xf32>
    %15 = vector.broadcast %2 : vector<1x32xf32> to vector<8x32xf32>
    %16 = arith.addf %14, %15 : vector<8x32xf32>
    %cst_14 = arith.constant 0.000000e+00 : f32
    %17 = vector.broadcast %cst_14 : f32 to vector<8x32xf32>
    %18 = arith.maximumf %16, %17 : vector<8x32xf32>
    %c0_15 = arith.constant 0 : index
    %c0_16 = arith.constant 0 : index
    %19 = vector.load %arg4[%c0_15, %c0_16] : memref<32x32xf32, #tpu.memory_space<vmem>>, vector<32x32xf32>
    %cst_17 = arith.constant dense<0.000000e+00> : vector<8x32xf32>
    %20 = tpu.matmul %18, %19, %cst_17 {dimension_numbers = #tpu.dot_dimension_numbers<[1], [0], [0], [1], [0, 0, 1, 1], [], []>} : vector<8x32xf32>, vector<32x32xf32>, vector<8x32xf32> -> vector<8x32xf32>
    %21 = vector.broadcast %3 : vector<1x32xf32> to vector<8x32xf32>
    %22 = arith.addf %20, %21 : vector<8x32xf32>
    %cst_18 = arith.constant 0.000000e+00 : f32
    %23 = vector.broadcast %cst_18 : f32 to vector<8x32xf32>
    %24 = arith.maximumf %22, %23 : vector<8x32xf32>
    %c0_19 = arith.constant 0 : index
    %c0_20 = arith.constant 0 : index
    %25 = vector.load %arg5[%c0_19, %c0_20] : memref<32x18xf32, #tpu.memory_space<vmem>>, vector<32x18xf32>
    %cst_21 = arith.constant dense<0.000000e+00> : vector<8x18xf32>
    %26 = tpu.matmul %24, %25, %cst_21 {dimension_numbers = #tpu.dot_dimension_numbers<[1], [0], [0], [1], [0, 0, 1, 1], [], []>} : vector<8x32xf32>, vector<32x18xf32>, vector<8x18xf32> -> vector<8x18xf32>
    %27 = vector.broadcast %4 : vector<1x18xf32> to vector<8x18xf32>
    %28 = arith.addf %26, %27 : vector<8x18xf32>
    %29 = vector.extract_strided_slice %28 {offsets = [0, 0], sizes = [8, 2], strides = [1, 1]} : vector<8x18xf32> to vector<8x2xf32>
    %cst_22 = arith.constant dense<0xFF800000> : vector<8xf32>
    %30 = vector.multi_reduction <maximumf>, %29, %cst_22 [1] : vector<8x2xf32> to vector<8xf32>
    %31 = vector.shape_cast %30 : vector<8xf32> to vector<8x1xf32>
    %32 = vector.broadcast %31 : vector<8x1xf32> to vector<8x2xf32>
    %33 = arith.subf %29, %32 : vector<8x2xf32>
    %34 = math.exp %33 : vector<8x2xf32>
    %cst_23 = arith.constant dense<0.000000e+00> : vector<8xf32>
    %35 = vector.multi_reduction <add>, %34, %cst_23 [1] : vector<8x2xf32> to vector<8xf32>
    %36 = vector.shape_cast %35 : vector<8xf32> to vector<8x1xf32>
    %37 = tpu.reciprocal %36 : vector<8x1xf32> -> vector<8x1xf32>
    %38 = vector.broadcast %37 : vector<8x1xf32> to vector<8x2xf32>
    %39 = arith.mulf %34, %38 : vector<8x2xf32>
    %40 = vector.extract_strided_slice %28 {offsets = [0, 2], sizes = [8, 16], strides = [1, 1]} : vector<8x18xf32> to vector<8x16xf32>
    %cst_24 = arith.constant 0.000000e+00 : f32
    %41 = vector.broadcast %cst_24 : f32 to vector<8x16xf32>
    %42 = arith.maximumf %40, %41 : vector<8x16xf32>
    %c0_25 = arith.constant 0 : index
    %c0_26 = arith.constant 0 : index
    %43 = vector.load %arg6[%c0_25, %c0_26] : memref<16x8xf32, #tpu.memory_space<vmem>>, vector<16x8xf32>
    %cst_27 = arith.constant dense<0.000000e+00> : vector<8x8xf32>
    %44 = tpu.matmul %42, %43, %cst_27 {dimension_numbers = #tpu.dot_dimension_numbers<[1], [0], [0], [1], [0, 0, 1, 1], [], []>} : vector<8x16xf32>, vector<16x8xf32>, vector<8x8xf32> -> vector<8x8xf32>
    %45 = vector.broadcast %5 : vector<1x8xf32> to vector<8x8xf32>
    %46 = arith.addf %44, %45 : vector<8x8xf32>
    %cst_28 = arith.constant 0.000000e+00 : f32
    %47 = vector.broadcast %cst_28 : f32 to vector<8x8xf32>
    %48 = arith.maximumf %46, %47 : vector<8x8xf32>
    %c0_29 = arith.constant 0 : index
    %c0_30 = arith.constant 0 : index
    %49 = vector.load %arg7[%c0_29, %c0_30] : memref<8x1xf32, #tpu.memory_space<vmem>>, vector<8x1xf32>
    %cst_31 = arith.constant dense<0.000000e+00> : vector<8x1xf32>
    %50 = tpu.matmul %48, %49, %cst_31 {dimension_numbers = #tpu.dot_dimension_numbers<[1], [0], [0], [1], [0, 0, 1, 1], [], []>} : vector<8x8xf32>, vector<8x1xf32>, vector<8x1xf32> -> vector<8x1xf32>
    %51 = vector.broadcast %6 : vector<1x1xf32> to vector<8x1xf32>
    %52 = arith.addf %50, %51 : vector<8x1xf32>
    %53 = tpu.concatenate %39, %52 in 1 : vector<8x2xf32>, vector<8x1xf32> -> vector<8x3xf32>
    %c0_32 = arith.constant 0 : index
    %c0_33 = arith.constant 0 : index
    %54 = vector.load %arg9[%c0_32, %c0_33] : memref<8x3xf32, #tpu.memory_space<vmem>>, vector<8x3xf32>
    tpu.vector_store %arg9[%c0_32, %c0_33], %53 {strides = array<i32>} : memref<8x3xf32, #tpu.memory_space<vmem>>, vector<8x3xf32>,
    return
  }
  func.func @transform_0(%arg0: i32) -> (i32, i32) {
    %c0_i32 = arith.constant 0 : i32
    %c0_i32_0 = arith.constant 0 : i32
    return %arg0, %c0_i32 : i32, i32
  }
  func.func @transform_1(%arg0: i32) -> (i32, i32) {
    %c0_i32 = arith.constant 0 : i32
    %c0_i32_0 = arith.constant 0 : i32
    %c0_i32_1 = arith.constant 0 : i32
    return %c0_i32, %c0_i32_0 : i32, i32
  }
  func.func @transform_2(%arg0: i32) -> (i32, i32) {
    %c0_i32 = arith.constant 0 : i32
    %c0_i32_0 = arith.constant 0 : i32
    %c0_i32_1 = arith.constant 0 : i32
    return %c0_i32, %c0_i32_0 : i32, i32
  }
  func.func @transform_3(%arg0: i32) -> (i32, i32) {
    %c0_i32 = arith.constant 0 : i32
    %c0_i32_0 = arith.constant 0 : i32
    %c0_i32_1 = arith.constant 0 : i32
    return %c0_i32, %c0_i32_0 : i32, i32
  }
  func.func @transform_4(%arg0: i32) -> (i32, i32) {
    %c0_i32 = arith.constant 0 : i32
    %c0_i32_0 = arith.constant 0 : i32
    %c0_i32_1 = arith.constant 0 : i32
    return %c0_i32, %c0_i32_0 : i32, i32
  }
  func.func @transform_5(%arg0: i32) -> (i32, i32) {
    %c0_i32 = arith.constant 0 : i32
    %c0_i32_0 = arith.constant 0 : i32
    %c0_i32_1 = arith.constant 0 : i32
    return %c0_i32, %c0_i32_0 : i32, i32
  }
  func.func @transform_6(%arg0: i32) -> (i32, i32) {
    %c0_i32 = arith.constant 0 : i32
    %c0_i32_0 = arith.constant 0 : i32
    %c0_i32_1 = arith.constant 0 : i32
    return %c0_i32, %c0_i32_0 : i32, i32
  }
  func.func @transform_7(%arg0: i32) -> (i32, i32) {
    %c0_i32 = arith.constant 0 : i32
    %c0_i32_0 = arith.constant 0 : i32
    %c0_i32_1 = arith.constant 0 : i32
    return %c0_i32, %c0_i32_0 : i32, i32
  }
  func.func @transform_8(%arg0: i32) -> (i32, i32) {
    %c0_i32 = arith.constant 0 : i32
    %c0_i32_0 = arith.constant 0 : i32
    return %arg0, %c0_i32 : i32, i32
  }
}

</mosaic_0001>

<llo_original>
// kernel: tpu_custom_call.1
$region0: #{tpu_custom_call.1}
  #allocation0 [shape = 'u32[]', space=smem, size = 0x4, offset = 0x4, fixed_abs, tag = 'smem constant byte address 0x4 - core index']
  #allocation1 [shape = 'u32[144,128]{1,0:T(1,128)}', space=vmem, size = 0x12000, scoped, tag = 'internal scratch']
  %s0 = inlined_call_operand.vmem [shape: f32[8,4], index: 0, kind: input, shape index: {}]
  %s1 = inlined_call_operand.vmem [shape: f32[4,32], index: 1, kind: input, shape index: {}]
  %s2 = inlined_call_operand.vmem [shape: f32[32,32], index: 2, kind: input, shape index: {}]
  %s3 = inlined_call_operand.vmem [shape: f32[32,32], index: 3, kind: input, shape index: {}]
  %s4 = inlined_call_operand.vmem [shape: f32[32,18], index: 4, kind: input, shape index: {}]
  %s5 = inlined_call_operand.vmem [shape: f32[16,8], index: 5, kind: input, shape index: {}]
  %s6 = inlined_call_operand.vmem [shape: f32[8,1], index: 6, kind: input, shape index: {}]
  %s7 = inlined_call_operand.vmem [shape: f32[8,128], index: 7, kind: input, shape index: {}]
  %s8 = inlined_call_operand.vmem [shape: f32[8,3], index: 8, kind: output, shape index: {}]
  %s9 = sld [smem:[#allocation0]]
  $region42: #{tpu_custom_call.1} parent=0
    _
  %s11 = ssub.s32 1, %s9
  %s12 = scalar_select 0, %s11, %s9
  // Predicated region
  $region2: #{tpu_custom_call.1} parent=0 // pred_check
    _
  $region3: #{tpu_custom_call.1} parent=0 // pred_check_branch
    %14 = sbr.rel (0) target = $region5
  $region4: #{tpu_custom_call.1} parent=0 // pred_region
    _
  $region5: #{tpu_custom_call.1} parent=0 // pred_fallthru
    _
  // Predicated region
  $region6: #{tpu_custom_call.1} parent=0 // pred_check
    _
  $region7: #{tpu_custom_call.1} parent=0 // pred_check_branch
    %16 = sbr.rel (0) target = $region9
  $region8: #{tpu_custom_call.1} parent=0 // pred_region
    _
  $region9: #{tpu_custom_call.1} parent=0 // pred_fallthru
    _
  // Predicated region
  $region10: #{tpu_custom_call.1} parent=0 // pred_check
    _
  $region11: #{tpu_custom_call.1} parent=0 // pred_check_branch
    %18 = sbr.rel (0) target = $region13
  $region12: #{tpu_custom_call.1} parent=0 // pred_region
    _
  $region13: #{tpu_custom_call.1} parent=0 // pred_fallthru
    _
  // Predicated region
  $region14: #{tpu_custom_call.1} parent=0 // pred_check
    _
  $region15: #{tpu_custom_call.1} parent=0 // pred_check_branch
    %20 = sbr.rel (0) target = $region17
  $region16: #{tpu_custom_call.1} parent=0 // pred_region
    _
  $region17: #{tpu_custom_call.1} parent=0 // pred_fallthru
    _
  // Predicated region
  $region18: #{tpu_custom_call.1} parent=0 // pred_check
    _
  $region19: #{tpu_custom_call.1} parent=0 // pred_check_branch
    %22 = sbr.rel (0) target = $region21
  $region20: #{tpu_custom_call.1} parent=0 // pred_region
    _
  $region21: #{tpu_custom_call.1} parent=0 // pred_fallthru
    _
  // Predicated region
  $region22: #{tpu_custom_call.1} parent=0 // pred_check
    _
  $region23: #{tpu_custom_call.1} parent=0 // pred_check_branch
    %24 = sbr.rel (0) target = $region25
  $region24: #{tpu_custom_call.1} parent=0 // pred_region
    _
  $region25: #{tpu_custom_call.1} parent=0 // pred_fallthru
    _
  // Predicated region
  $region26: #{tpu_custom_call.1} parent=0 // pred_check
    _
  $region27: #{tpu_custom_call.1} parent=0 // pred_check_branch
    %26 = sbr.rel (0) target = $region29
  $region28: #{tpu_custom_call.1} parent=0 // pred_region
    _
  $region29: #{tpu_custom_call.1} parent=0 // pred_fallthru
    _
  // Predicated region
  $region30: #{tpu_custom_call.1} parent=0 // pred_check
    _
  $region31: #{tpu_custom_call.1} parent=0 // pred_check_branch
    %28 = sbr.rel (0) target = $region33
  $region32: #{tpu_custom_call.1} parent=0 // pred_region
    _
  $region33: #{tpu_custom_call.1} parent=0 // pred_fallthru
    _
  %v29 = vld [vmem:[%s0] sm:$0xff]
  %v30 = vld [vmem:[%s7] sm:$0x1]
  %v31 = vld [vmem:[%s7 + $0x1] sm:$0x1]
  %v32 = vld [vmem:[%s7 + $0x2] sm:$0x1]
  %v33 = vld [vmem:[%s7 + $0x3] sm:$0x1]
  %v34 = vld [vmem:[%s7 + $0x4] sm:$0x1]
  %v35 = vld [vmem:[%s7 + $0x5] sm:$0x1]
  %v36 = vld [vmem:[%s1] sm:$0xf]
  %v37 = vlaneseq
  %v38 = vshrl.u32 %v37, 7
  %v39 = vsub.s32 0, %v38
  %v40 = vrot.slane %v30, %v39
  %vm41 = vcmask 31744
  %v43 = vsel %vm41, %v29, 0
  %vm45 = vcmask 1043456
  %v47 = vsel %vm45, %v36, 0
  %49 = vmatprep.subr.mxu0 0.0
  %50 = vmatpush1.msra.mxu0 %v47
  %51 = vmatprep.subr.mxu0 0.0
  %52 = vmatpush1.msra.mxu0 0.0
  %53 = vmatprep.subr.mxu0 0.0
  %54 = vmatpush1.msra.mxu0 0.0
  %55 = vmatprep.subr.mxu0 0.0
  %56 = vmatpush1.msra.mxu0 0.0
  %57 = vmatprep.subr.mxu0 0.0
  %58 = vmatpush1.msra.mxu0 0.0
  %59 = vmatprep.subr.mxu0 0.0
  %60 = vmatpush1.msra.mxu0 0.0
  %61 = vmatprep.subr.mxu0 0.0
  %62 = vmatpush1.msra.mxu0 0.0
  %63 = vmatprep.subr.mxu0 0.0
  %64 = vmatpush1.msra.mxu0 0.0
  %65 = vmatprep.subr.mxu0 0.0
  %66 = vmatpush1.msra.mxu0 0.0
  %67 = vmatprep.subr.mxu0 0.0
  %68 = vmatpush1.msra.mxu0 0.0
  %69 = vmatprep.subr.mxu0 0.0
  %70 = vmatpush1.msra.mxu0 0.0
  %71 = vmatprep.subr.mxu0 0.0
  %72 = vmatpush1.msra.mxu0 0.0
  %73 = vmatprep.subr.mxu0 0.0
  %74 = vmatpush1.msra.mxu0 0.0
  %75 = vmatprep.subr.mxu0 0.0
  %76 = vmatpush1.msra.mxu0 0.0
  %77 = vmatprep.subr.mxu0 0.0
  %78 = vmatpush1.msra.mxu0 0.0
  %79 = vmatprep.subr.mxu0 0.0
  %80 = vmatpush1.msra.mxu0 0.0
  %81 = vmatprep.subr.mxu0 0.0
  %82 = vmatpush1.msra.mxu0 0.0
  %83 = vmatprep.subr.mxu0 0.0
  %84 = vmatpush1.msra.mxu0 0.0
  %85 = vmatprep.subr.mxu0 0.0
  %86 = vmatpush1.msra.mxu0 0.0
  %87 = vmatprep.subr.mxu0 0.0
  %88 = vmatpush1.msra.mxu0 0.0
  %89 = vmatprep.subr.mxu0 0.0
  %90 = vmatpush1.msra.mxu0 0.0
  %91 = vmatprep.subr.mxu0 0.0
  %92 = vmatpush1.msra.mxu0 0.0
  %93 = vmatprep.subr.mxu0 0.0
  %94 = vmatpush1.msra.mxu0 0.0
  %95 = vmatprep.subr.mxu0 0.0
  %96 = vmatpush1.msra.mxu0 0.0
  %97 = vmatprep.subr.mxu0 0.0
  %98 = vmatpush1.msra.mxu0 0.0
  %99 = vmatprep.subr.mxu0 0.0
  %100 = vmatpush1.msra.mxu0 0.0
  %101 = vmatprep.subr.mxu0 0.0
  %102 = vmatpush1.msra.mxu0 0.0
  %103 = vmatprep.subr.mxu0 0.0
  %104 = vmatpush1.msra.mxu0 0.0
  %105 = vmatprep.subr.mxu0 0.0
  %106 = vmatpush1.msra.mxu0 0.0
  %107 = vmatprep.subr.mxu0 0.0
  %108 = vmatpush1.msra.mxu0 0.0
  %109 = vmatprep.subr.mxu0 0.0
  %110 = vmatpush1.msra.mxu0 0.0
  %111 = vmatprep.subr.mxu0 0.0
  %112 = vmatpush1.msra.mxu0 0.0
  %113 = vmatprep.mubr.f32.mxu0 0.0
  %114 = vmatmul.mubr.f32.gmra.mrb[0].mxu0 %v43
  %v115 = vpop.f32.mrb[0].mxu0
  %v116 = vadd.f32 %v40, %v115
  %v117 = vpop.f32.mrb[0].mxu0
  %118 = vdwg.mxu0
  %v119 = vmax.f32 %v116, 0.0
  %v120 = vld [vmem:[%s2] sm:$0xff]
  %v121 = vld [vmem:[%s2 + $0x8] sm:$0xff]
  %v122 = vld [vmem:[%s2 + $0x10] sm:$0xff]
  %v123 = vld [vmem:[%s2 + $0x18] sm:$0xff]
  %v124 = vlaneseq
  %v125 = vshrl.u32 %v124, 7
  %v126 = vsub.s32 0, %v125
  %v127 = vrot.slane %v31, %v126
  %vm128 = vcmask 261120
  %v130 = vsel %vm128, %v119, 0
  %132 = vmatprep.subr.mxu0 0.0
  %133 = vmatpush1.msra.mxu0 %v120
  %134 = vmatprep.subr.mxu0 0.0
  %135 = vmatpush1.msra.mxu0 %v121
  %136 = vmatprep.subr.mxu0 0.0
  %137 = vmatpush1.msra.mxu0 %v122
  %138 = vmatprep.subr.mxu0 0.0
  %139 = vmatpush1.msra.mxu0 %v123
  %140 = vmatprep.subr.mxu0 0.0
  %141 = vmatpush1.msra.mxu0 0.0
  %142 = vmatprep.subr.mxu0 0.0
  %143 = vmatpush1.msra.mxu0 0.0
  %144 = vmatprep.subr.mxu0 0.0
  %145 = vmatpush1.msra.mxu0 0.0
  %146 = vmatprep.subr.mxu0 0.0
  %147 = vmatpush1.msra.mxu0 0.0
  %148 = vmatprep.subr.mxu0 0.0
  %149 = vmatpush1.msra.mxu0 0.0
  %150 = vmatprep.subr.mxu0 0.0
  %151 = vmatpush1.msra.mxu0 0.0
  %152 = vmatprep.subr.mxu0 0.0
  %153 = vmatpush1.msra.mxu0 0.0
  %154 = vmatprep.subr.mxu0 0.0
  %155 = vmatpush1.msra.mxu0 0.0
  %156 = vmatprep.subr.mxu0 0.0
  %157 = vmatpush1.msra.mxu0 0.0
  %158 = vmatprep.subr.mxu0 0.0
  %159 = vmatpush1.msra.mxu0 0.0
  %160 = vmatprep.subr.mxu0 0.0
  %161 = vmatpush1.msra.mxu0 0.0
  %162 = vmatprep.subr.mxu0 0.0
  %163 = vmatpush1.msra.mxu0 0.0
  %164 = vmatprep.subr.mxu0 0.0
  %165 = vmatpush1.msra.mxu0 0.0
  %166 = vmatprep.subr.mxu0 0.0
  %167 = vmatpush1.msra.mxu0 0.0
  %168 = vmatprep.subr.mxu0 0.0
  %169 = vmatpush1.msra.mxu0 0.0
  %170 = vmatprep.subr.mxu0 0.0
  %171 = vmatpush1.msra.mxu0 0.0
  %172 = vmatprep.subr.mxu0 0.0
  %173 = vmatpush1.msra.mxu0 0.0
  %174 = vmatprep.subr.mxu0 0.0
  %175 = vmatpush1.msra.mxu0 0.0
  %176 = vmatprep.subr.mxu0 0.0
  %177 = vmatpush1.msra.mxu0 0.0
  %178 = vmatprep.subr.mxu0 0.0
  %179 = vmatpush1.msra.mxu0 0.0
  %180 = vmatprep.subr.mxu0 0.0
  %181 = vmatpush1.msra.mxu0 0.0
  %182 = vmatprep.subr.mxu0 0.0
  %183 = vmatpush1.msra.mxu0 0.0
  %184 = vmatprep.subr.mxu0 0.0
  %185 = vmatpush1.msra.mxu0 0.0
  %186 = vmatprep.subr.mxu0 0.0
  %187 = vmatpush1.msra.mxu0 0.0
  %188 = vmatprep.subr.mxu0 0.0
  %189 = vmatpush1.msra.mxu0 0.0
  %190 = vmatprep.subr.mxu0 0.0
  %191 = vmatpush1.msra.mxu0 0.0
  %192 = vmatprep.subr.mxu0 0.0
  %193 = vmatpush1.msra.mxu0 0.0
  %194 = vmatprep.subr.mxu0 0.0
  %195 = vmatpush1.msra.mxu0 0.0
  %196 = vmatprep.mubr.f32.mxu0 0.0
  %197 = vmatmul.mubr.f32.gmra.mrb[0].mxu0 %v130
  %v198 = vpop.f32.mrb[0].mxu0
  %v199 = vadd.f32 %v127, %v198
  %v200 = vpop.f32.mrb[0].mxu0
  %201 = vdwg.mxu0
  %v202 = vmax.f32 %v199, 0.0
  %v203 = vld [vmem:[%s3] sm:$0xff]
  %v204 = vld [vmem:[%s3 + $0x8] sm:$0xff]
  %v205 = vld [vmem:[%s3 + $0x10] sm:$0xff]
  %v206 = vld [vmem:[%s3 + $0x18] sm:$0xff]
  %v207 = vlaneseq
  %v208 = vshrl.u32 %v207, 7
  %v209 = vsub.s32 0, %v208
  %v210 = vrot.slane %v32, %v209
  %v212 = vsel %vm128, %v202, 0
  %214 = vmatprep.subr.mxu0 0.0
  %215 = vmatpush1.msra.mxu0 %v203
  %216 = vmatprep.subr.mxu0 0.0
  %217 = vmatpush1.msra.mxu0 %v204
  %218 = vmatprep.subr.mxu0 0.0
  %219 = vmatpush1.msra.mxu0 %v205
  %220 = vmatprep.subr.mxu0 0.0
  %221 = vmatpush1.msra.mxu0 %v206
  %222 = vmatprep.subr.mxu0 0.0
  %223 = vmatpush1.msra.mxu0 0.0
  %224 = vmatprep.subr.mxu0 0.0
  %225 = vmatpush1.msra.mxu0 0.0
  %226 = vmatprep.subr.mxu0 0.0
  %227 = vmatpush1.msra.mxu0 0.0
  %228 = vmatprep.subr.mxu0 0.0
  %229 = vmatpush1.msra.mxu0 0.0
  %230 = vmatprep.subr.mxu0 0.0
  %231 = vmatpush1.msra.mxu0 0.0
  %232 = vmatprep.subr.mxu0 0.0
  %233 = vmatpush1.msra.mxu0 0.0
  %234 = vmatprep.subr.mxu0 0.0
  %235 = vmatpush1.msra.mxu0 0.0
  %236 = vmatprep.subr.mxu0 0.0
  %237 = vmatpush1.msra.mxu0 0.0
  %238 = vmatprep.subr.mxu0 0.0
  %239 = vmatpush1.msra.mxu0 0.0
  %240 = vmatprep.subr.mxu0 0.0
  %241 = vmatpush1.msra.mxu0 0.0
  %242 = vmatprep.subr.mxu0 0.0
  %243 = vmatpush1.msra.mxu0 0.0
  %244 = vmatprep.subr.mxu0 0.0
  %245 = vmatpush1.msra.mxu0 0.0
  %246 = vmatprep.subr.mxu0 0.0
  %247 = vmatpush1.msra.mxu0 0.0
  %248 = vmatprep.subr.mxu0 0.0
  %249 = vmatpush1.msra.mxu0 0.0
  %250 = vmatprep.subr.mxu0 0.0
  %251 = vmatpush1.msra.mxu0 0.0
  %252 = vmatprep.subr.mxu0 0.0
  %253 = vmatpush1.msra.mxu0 0.0
  %254 = vmatprep.subr.mxu0 0.0
  %255 = vmatpush1.msra.mxu0 0.0
  %256 = vmatprep.subr.mxu0 0.0
  %257 = vmatpush1.msra.mxu0 0.0
  %258 = vmatprep.subr.mxu0 0.0
  %259 = vmatpush1.msra.mxu0 0.0
  %260 = vmatprep.subr.mxu0 0.0
  %261 = vmatpush1.msra.mxu0 0.0
  %262 = vmatprep.subr.mxu0 0.0
  %263 = vmatpush1.msra.mxu0 0.0
  %264 = vmatprep.subr.mxu0 0.0
  %265 = vmatpush1.msra.mxu0 0.0
  %266 = vmatprep.subr.mxu0 0.0
  %267 = vmatpush1.msra.mxu0 0.0
  %268 = vmatprep.subr.mxu0 0.0
  %269 = vmatpush1.msra.mxu0 0.0
  %270 = vmatprep.subr.mxu0 0.0
  %271 = vmatpush1.msra.mxu0 0.0
  %272 = vmatprep.subr.mxu0 0.0
  %273 = vmatpush1.msra.mxu0 0.0
  %274 = vmatprep.subr.mxu0 0.0
  %275 = vmatpush1.msra.mxu0 0.0
  %276 = vmatprep.subr.mxu0 0.0
  %277 = vmatpush1.msra.mxu0 0.0
  %278 = vmatprep.mubr.f32.mxu0 0.0
  %279 = vmatmul.mubr.f32.gmra.mrb[0].mxu0 %v212
  %v280 = vpop.f32.mrb[0].mxu0
  %v281 = vadd.f32 %v210, %v280
  %v282 = vpop.f32.mrb[0].mxu0
  %283 = vdwg.mxu0
  %v284 = vmax.f32 %v281, 0.0
  %v285 = vld [vmem:[%s4] sm:$0xff]
  %v286 = vld [vmem:[%s4 + $0x8] sm:$0xff]
  %v287 = vld [vmem:[%s4 + $0x10] sm:$0xff]
  %v288 = vld [vmem:[%s4 + $0x18] sm:$0xff]
  %v289 = vlaneseq
  %v290 = vshrl.u32 %v289, 7
  %v291 = vsub.s32 0, %v290
  %v292 = vrot.slane %v33, %v291
  %v294 = vsel %vm128, %v284, 0
  %296 = vmatprep.subr.mxu0 0.0
  %297 = vmatpush1.msra.mxu0 %v285
  %298 = vmatprep.subr.mxu0 0.0
  %299 = vmatpush1.msra.mxu0 %v286
  %300 = vmatprep.subr.mxu0 0.0
  %301 = vmatpush1.msra.mxu0 %v287
  %302 = vmatprep.subr.mxu0 0.0
  %303 = vmatpush1.msra.mxu0 %v288
  %304 = vmatprep.subr.mxu0 0.0
  %305 = vmatpush1.msra.mxu0 0.0
  %306 = vmatprep.subr.mxu0 0.0
  %307 = vmatpush1.msra.mxu0 0.0
  %308 = vmatprep.subr.mxu0 0.0
  %309 = vmatpush1.msra.mxu0 0.0
  %310 = vmatprep.subr.mxu0 0.0
  %311 = vmatpush1.msra.mxu0 0.0
  %312 = vmatprep.subr.mxu0 0.0
  %313 = vmatpush1.msra.mxu0 0.0
  %314 = vmatprep.subr.mxu0 0.0
  %315 = vmatpush1.msra.mxu0 0.0
  %316 = vmatprep.subr.mxu0 0.0
  %317 = vmatpush1.msra.mxu0 0.0
  %318 = vmatprep.subr.mxu0 0.0
  %319 = vmatpush1.msra.mxu0 0.0
  %320 = vmatprep.subr.mxu0 0.0
  %321 = vmatpush1.msra.mxu0 0.0
  %322 = vmatprep.subr.mxu0 0.0
  %323 = vmatpush1.msra.mxu0 0.0
  %324 = vmatprep.subr.mxu0 0.0
  %325 = vmatpush1.msra.mxu0 0.0
  %326 = vmatprep.subr.mxu0 0.0
  %327 = vmatpush1.msra.mxu0 0.0
  %328 = vmatprep.subr.mxu0 0.0
  %329 = vmatpush1.msra.mxu0 0.0
  %330 = vmatprep.subr.mxu0 0.0
  %331 = vmatpush1.msra.mxu0 0.0
  %332 = vmatprep.subr.mxu0 0.0
  %333 = vmatpush1.msra.mxu0 0.0
  %334 = vmatprep.subr.mxu0 0.0
  %335 = vmatpush1.msra.mxu0 0.0
  %336 = vmatprep.subr.mxu0 0.0
  %337 = vmatpush1.msra.mxu0 0.0
  %338 = vmatprep.subr.mxu0 0.0
  %339 = vmatpush1.msra.mxu0 0.0
  %340 = vmatprep.subr.mxu0 0.0
  %341 = vmatpush1.msra.mxu0 0.0
  %342 = vmatprep.subr.mxu0 0.0
  %343 = vmatpush1.msra.mxu0 0.0
  %344 = vmatprep.subr.mxu0 0.0
  %345 = vmatpush1.msra.mxu0 0.0
  %346 = vmatprep.subr.mxu0 0.0
  %347 = vmatpush1.msra.mxu0 0.0
  %348 = vmatprep.subr.mxu0 0.0
  %349 = vmatpush1.msra.mxu0 0.0
  %350 = vmatprep.subr.mxu0 0.0
  %351 = vmatpush1.msra.mxu0 0.0
  %352 = vmatprep.subr.mxu0 0.0
  %353 = vmatpush1.msra.mxu0 0.0
  %354 = vmatprep.subr.mxu0 0.0
  %355 = vmatpush1.msra.mxu0 0.0
  %356 = vmatprep.subr.mxu0 0.0
  %357 = vmatpush1.msra.mxu0 0.0
  %358 = vmatprep.subr.mxu0 0.0
  %359 = vmatpush1.msra.mxu0 0.0
  %360 = vmatprep.mubr.f32.mxu0 0.0
  %361 = vmatmul.mubr.f32.gmra.mrb[0].mxu0 %v294
  %v362 = vpop.f32.mrb[0].mxu0
  %v363 = vadd.f32 %v292, %v362
  %v364 = vpop.f32.mrb[0].mxu0
  %365 = vdwg.mxu0
  %vm366 = vcmask 15360
  %v367 = vsel %vm366, %v363, -inf
  %368 = vmax.xlane.f32.xlu0 %v367
  %v369 = vpop.xlane.xlu0 %368
  %v370 = vsub.f32 %v363, %v369
  %v371 = vmul.f32 %v370, 1.442695
  %v372 = vpow.pop %v371
  %v373 = vsel %vm366, %v372, 0.0
  %374 = vadd.xlane.f32.xlu0 %v373
  %v375 = vpop.xlane.xlu0 %374
  %v376 = vrcp.pop %v375
  %v377 = vmul.f32 %v372, %v376
  %v378 = vmax.f32 %v363, 0.0
  %v379 = vld [vmem:[%s5] sm:$0xff]
  %v380 = vld [vmem:[%s5 + $0x8] sm:$0xff]
  %v381 = vlaneseq
  %v382 = vshrl.u32 %v381, 7
  %v383 = vsub.s32 0, %v382
  %v384 = vrot.slane %v34, %v383
  %386 = vrot.lane.b32.xlu0 %v378, 126
  %v387 = vpop.permute.xlu0 %386
  %vm388 = vcmask 130048
  %v389 = vsel %vm388, %v387, 0
  %391 = vmatprep.subr.mxu0 0.0
  %392 = vmatpush1.msra.mxu0 %v379
  %393 = vmatprep.subr.mxu0 0.0
  %394 = vmatpush1.msra.mxu0 %v380
  %395 = vmatprep.subr.mxu0 0.0
  %396 = vmatpush1.msra.mxu0 0.0
  %397 = vmatprep.subr.mxu0 0.0
  %398 = vmatpush1.msra.mxu0 0.0
  %399 = vmatprep.subr.mxu0 0.0
  %400 = vmatpush1.msra.mxu0 0.0
  %401 = vmatprep.subr.mxu0 0.0
  %402 = vmatpush1.msra.mxu0 0.0
  %403 = vmatprep.subr.mxu0 0.0
  %404 = vmatpush1.msra.mxu0 0.0
  %405 = vmatprep.subr.mxu0 0.0
  %406 = vmatpush1.msra.mxu0 0.0
  %407 = vmatprep.subr.mxu0 0.0
  %408 = vmatpush1.msra.mxu0 0.0
  %409 = vmatprep.subr.mxu0 0.0
  %410 = vmatpush1.msra.mxu0 0.0
  %411 = vmatprep.subr.mxu0 0.0
  %412 = vmatpush1.msra.mxu0 0.0
  %413 = vmatprep.subr.mxu0 0.0
  %414 = vmatpush1.msra.mxu0 0.0
  %415 = vmatprep.subr.mxu0 0.0
  %416 = vmatpush1.msra.mxu0 0.0
  %417 = vmatprep.subr.mxu0 0.0
  %418 = vmatpush1.msra.mxu0 0.0
  %419 = vmatprep.subr.mxu0 0.0
  %420 = vmatpush1.msra.mxu0 0.0
  %421 = vmatprep.subr.mxu0 0.0
  %422 = vmatpush1.msra.mxu0 0.0
  %423 = vmatprep.subr.mxu0 0.0
  %424 = vmatpush1.msra.mxu0 0.0
  %425 = vmatprep.subr.mxu0 0.0
  %426 = vmatpush1.msra.mxu0 0.0
  %427 = vmatprep.subr.mxu0 0.0
  %428 = vmatpush1.msra.mxu0 0.0
  %429 = vmatprep.subr.mxu0 0.0
  %430 = vmatpush1.msra.mxu0 0.0
  %431 = vmatprep.subr.mxu0 0.0
  %432 = vmatpush1.msra.mxu0 0.0
  %433 = vmatprep.subr.mxu0 0.0
  %434 = vmatpush1.msra.mxu0 0.0
  %435 = vmatprep.subr.mxu0 0.0
  %436 = vmatpush1.msra.mxu0 0.0
  %437 = vmatprep.subr.mxu0 0.0
  %438 = vmatpush1.msra.mxu0 0.0
  %439 = vmatprep.subr.mxu0 0.0
  %440 = vmatpush1.msra.mxu0 0.0
  %441 = vmatprep.subr.mxu0 0.0
  %442 = vmatpush1.msra.mxu0 0.0
  %443 = vmatprep.subr.mxu0 0.0
  %444 = vmatpush1.msra.mxu0 0.0
  %445 = vmatprep.subr.mxu0 0.0
  %446 = vmatpush1.msra.mxu0 0.0
  %447 = vmatprep.subr.mxu0 0.0
  %448 = vmatpush1.msra.mxu0 0.0
  %449 = vmatprep.subr.mxu0 0.0
  %450 = vmatpush1.msra.mxu0 0.0
  %451 = vmatprep.subr.mxu0 0.0
  %452 = vmatpush1.msra.mxu0 0.0
  %453 = vmatprep.subr.mxu0 0.0
  %454 = vmatpush1.msra.mxu0 0.0
  %455 = vmatprep.mubr.f32.mxu0 0.0
  %456 = vmatmul.mubr.f32.gmra.mrb[0].mxu0 %v389
  %v457 = vpop.f32.mrb[0].mxu0
  %v458 = vadd.f32 %v384, %v457
  %v459 = vpop.f32.mrb[0].mxu0
  %460 = vdwg.mxu0
  %v461 = vmax.f32 %v458, 0.0
  %v462 = vld [vmem:[%s6] sm:$0xff]
  %v463 = vlaneseq
  %v464 = vshrl.u32 %v463, 7
  %v465 = vsub.s32 0, %v464
  %v466 = vrot.slane %v35, %v465
  %vm467 = vcmask 64512
  %v469 = vsel %vm467, %v461, 0
  %471 = vmatprep.subr.mxu0 0.0
  %472 = vmatpush1.msra.mxu0 %v462
  %473 = vmatprep.subr.mxu0 0.0
  %474 = vmatpush1.msra.mxu0 0.0
  %475 = vmatprep.subr.mxu0 0.0
  %476 = vmatpush1.msra.mxu0 0.0
  %477 = vmatprep.subr.mxu0 0.0
  %478 = vmatpush1.msra.mxu0 0.0
  %479 = vmatprep.subr.mxu0 0.0
  %480 = vmatpush1.msra.mxu0 0.0
  %481 = vmatprep.subr.mxu0 0.0
  %482 = vmatpush1.msra.mxu0 0.0
  %483 = vmatprep.subr.mxu0 0.0
  %484 = vmatpush1.msra.mxu0 0.0
  %485 = vmatprep.subr.mxu0 0.0
  %486 = vmatpush1.msra.mxu0 0.0
  %487 = vmatprep.subr.mxu0 0.0
  %488 = vmatpush1.msra.mxu0 0.0
  %489 = vmatprep.subr.mxu0 0.0
  %490 = vmatpush1.msra.mxu0 0.0
  %491 = vmatprep.subr.mxu0 0.0
  %492 = vmatpush1.msra.mxu0 0.0
  %493 = vmatprep.subr.mxu0 0.0
  %494 = vmatpush1.msra.mxu0 0.0
  %495 = vmatprep.subr.mxu0 0.0
  %496 = vmatpush1.msra.mxu0 0.0
  %497 = vmatprep.subr.mxu0 0.0
  %498 = vmatpush1.msra.mxu0 0.0
  %499 = vmatprep.subr.mxu0 0.0
  %500 = vmatpush1.msra.mxu0 0.0
  %501 = vmatprep.subr.mxu0 0.0
  %502 = vmatpush1.msra.mxu0 0.0
  %503 = vmatprep.subr.mxu0 0.0
  %504 = vmatpush1.msra.mxu0 0.0
  %505 = vmatprep.subr.mxu0 0.0
  %506 = vmatpush1.msra.mxu0 0.0
  %507 = vmatprep.subr.mxu0 0.0
  %508 = vmatpush1.msra.mxu0 0.0
  %509 = vmatprep.subr.mxu0 0.0
  %510 = vmatpush1.msra.mxu0 0.0
  %511 = vmatprep.subr.mxu0 0.0
  %512 = vmatpush1.msra.mxu0 0.0
  %513 = vmatprep.subr.mxu0 0.0
  %514 = vmatpush1.msra.mxu0 0.0
  %515 = vmatprep.subr.mxu0 0.0
  %516 = vmatpush1.msra.mxu0 0.0
  %517 = vmatprep.subr.mxu0 0.0
  %518 = vmatpush1.msra.mxu0 0.0
  %519 = vmatprep.subr.mxu0 0.0
  %520 = vmatpush1.msra.mxu0 0.0
  %521 = vmatprep.subr.mxu0 0.0
  %522 = vmatpush1.msra.mxu0 0.0
  %523 = vmatprep.subr.mxu0 0.0
  %524 = vmatpush1.msra.mxu0 0.0
  %525 = vmatprep.subr.mxu0 0.0
  %526 = vmatpush1.msra.mxu0 0.0
  %527 = vmatprep.subr.mxu0 0.0
  %528 = vmatpush1.msra.mxu0 0.0
  %529 = vmatprep.subr.mxu0 0.0
  %530 = vmatpush1.msra.mxu0 0.0
  %531 = vmatprep.subr.mxu0 0.0
  %532 = vmatpush1.msra.mxu0 0.0
  %533 = vmatprep.subr.mxu0 0.0
  %534 = vmatpush1.msra.mxu0 0.0
  %535 = vmatprep.mubr.f32.mxu0 0.0
  %536 = vmatmul.mubr.f32.gmra.mrb[0].mxu0 %v469
  %v537 = vpop.f32.mrb[0].mxu0
  %v538 = vadd.f32 %v466, %v537
  %v539 = vpop.f32.mrb[0].mxu0
  %540 = vdwg.mxu0
  %542 = vrot.lane.b32.xlu0 %v538, 2
  %v543 = vpop.permute.xlu0 %542
  %v545 = vsel %vm366, %v377, %v543
  %vm546 = vcmask 23552
  %547 = vst.msk [vmem:[%s8] sm:$0xff] %vm546, %v545
  // Predicated region
  $region34: #{tpu_custom_call.1} parent=0 // pred_check
    _
  $region35: #{tpu_custom_call.1} parent=0 // pred_check_branch
    %549 = sbr.rel (0) target = $region37
  $region36: #{tpu_custom_call.1} parent=0 // pred_region
    _
  $region37: #{tpu_custom_call.1} parent=0 // pred_fallthru
    _
  // Predicated region
  $region38: #{tpu_custom_call.1} parent=0 // pred_check
    _
  $region39: #{tpu_custom_call.1} parent=0 // pred_check_branch
    %551 = sbr.rel (0) target = $region41
  $region40: #{tpu_custom_call.1} parent=0 // pred_region
    _
  $region41: #{tpu_custom_call.1} parent=0 // pred_fallthru
    _

</llo_original>
